<compile_context>
chip_gen: v5e
topology: v5e:2x2
jax: 0.10.0
libtpu: 0.0.40
codegen_flags: <defaults>
</compile_context>

<pallas_src>
import math

import jax
import jax.numpy as jnp
import numpy as np
from jax import lax
from jax.experimental import pallas as pl
from jax.experimental.pallas import tpu as pltpu

_SENTINEL = np.int32(1 << 30)  # padding value, always >= total_steps


def _slicer_kernel(params_ref, idx_ref, out_ref, cnt_ref):
    """One grid step == one (num_steps, prev_steps) query.

    params_ref: SMEM int32[B, 2]   scalar-prefetch (num_steps, prev_steps) pairs.
    idx_ref:    VMEM int32[1, Np]  precomputed kept-token indices (sentinel
                                   padded, strictly increasing over real entries);
                                   resident across the whole grid.
    out_ref:    VMEM int32[1, 1, Np] this query's compacted (idx - prev_steps),
                                   padded with -1.
    cnt_ref:    SMEM int32[B]      number of valid entries per query (resident).
    """
    b = pl.program_id(0)
    num_steps = params_ref[b, 0]
    prev_steps = params_ref[b, 1]
    total = num_steps + prev_steps

    idx = idx_ref[...]                       # (1, Np) int32
    np_lanes = idx.shape[-1]

    # Fused predicates: one (2, Np) compare + ONE cross-lane reduction (XLU).
    #   row 0: idx < prev_steps   -> sum = start of valid window
    #   row 1: idx < total        -> sum = end of valid window
    row = lax.broadcasted_iota(jnp.int32, (2, np_lanes), 0)
    bound = jnp.where(row == 0, prev_steps, total)          # (2, Np)
    lt = (idx < bound).astype(jnp.int32)                    # broadcast (1,Np)->(2,Np)
    sums = jnp.sum(lt, axis=-1, keepdims=True)               # (2, 1), single XLU pass
    start = sums[0, 0]
    count = sums[1, 0] - start

    shifted = idx - prev_steps                               # (1, Np) int32

    # Compaction: out[j] = shifted[start + j] for j < count.  The valid region
    # is contiguous (indices strictly increasing), so this is a left-rotation
    # by `start` lanes.  Keep the start==0 guard (full-lane rotation wrap not
    # relied upon); it is one scalar select on the scalar unit.
    shift = jnp.where(start == 0, jnp.int32(0), jnp.int32(np_lanes) - start)
    rolled = pltpu.roll(shifted, shift, axis=1)              # single XLU dynamic rotate

    j = lax.broadcasted_iota(jnp.int32, (1, np_lanes), 1)
    result = jnp.where(j < count, rolled, jnp.int32(-1))     # (1, Np)
    out_ref[...] = result.reshape(1, 1, np_lanes)
    cnt_ref[b] = count


@jax.jit
def _compute_slices_jit(indices_padded: jax.Array, params: jax.Array):
    """indices_padded: (1, Np) int32 (device); params: (B, 2) int32 (device).

    Returns (out (B, Np) int32 padded with -1, counts (B,) int32), on device.
    """
    batch = params.shape[0]
    n_pad = indices_padded.shape[-1]
    out, cnt = pl.pallas_call(
        _slicer_kernel,
        out_shape=(
            jax.ShapeDtypeStruct((batch, 1, n_pad), jnp.int32),
            jax.ShapeDtypeStruct((batch,), jnp.int32),
        ),
        grid_spec=pltpu.PrefetchScalarGridSpec(
            num_scalar_prefetch=1,                       # params -> SMEM, pre-grid
            grid=(batch,),
            in_specs=[
                # Constant index buffer: same block every step -> fetched once,
                # stays resident in VMEM for the whole grid.
                pl.BlockSpec((1, n_pad), lambda b, p: (0, 0)),
            ],
            out_specs=(
                # Lane-dense (1, 1, Np) row per query; last two dims equal the
                # full array dims -> unmasked stores.
                pl.BlockSpec((1, 1, n_pad), lambda b, p: (b, 0, 0)),
                # Per-query counts: whole array resident in SMEM.
                pl.BlockSpec(memory_space=pltpu.MemorySpace.SMEM),
            ),
        ),
        compiler_params=pltpu.CompilerParams(
            dimension_semantics=("arbitrary",),
        ),
    )(params, indices_padded)
    return out.reshape(batch, n_pad), cnt


class SlicerPallas:
    """JAX/Pallas port of Slicer (forward() raises in PyTorch; compute_slice is the op)."""

    def __init__(self, max_blocks: int, block_mask: np.ndarray) -> None:
        block_mask = np.asarray(block_mask, dtype=bool)
        self.block_size = int(block_mask.shape[0])
        self.num_kept_tokens = int(block_mask.sum())
        kept = np.where(block_mask)[0].astype(np.int32)
        kept_rep = np.tile(kept, max_blocks)
        offsets = np.repeat(np.arange(max_blocks, dtype=np.int32),
                            self.num_kept_tokens)
        indices = kept_rep + np.int32(self.block_size) * offsets  # buffer 'indices'

        n = indices.shape[0]
        n_pad = max(128, ((n + 127) // 128) * 128)
        padded = np.full((1, n_pad), _SENTINEL, dtype=np.int32)
        padded[0, :n] = indices
        self.indices_padded = jnp.asarray(padded)  # (1, N_pad) int32, device-resident

    def compute_slices(self, params: jax.Array):
        """Batched: params (B, 2) int32 (num_steps, prev_steps) pairs, ideally
        already on device.  Returns ((B, Np) padded rows, (B,) counts), on device."""
        params = jnp.asarray(params, dtype=jnp.int32)
        return _compute_slices_jit(self.indices_padded, params)

    def compute_slice(self, num_steps: int, prev_steps: int = 0):
        """Single-query convenience (matches PyTorch signature).  Prefer
        compute_slices() when several queries are available — it amortizes
        dispatch and the index-buffer DMA over the whole batch."""
        params = jnp.asarray([[num_steps, prev_steps]], dtype=jnp.int32)
        out, cnt = _compute_slices_jit(self.indices_padded, params)
        return out[0], cnt[0]

    def forward(self, *args, **kwargs):
        raise NotImplementedError  # same as the PyTorch module


def _reference_compute_slice(max_blocks, block_mask, num_steps, prev_steps):
    """Pure-numpy transcription of the PyTorch compute_slice."""
    block_mask = np.asarray(block_mask, dtype=bool)
    block_size = block_mask.shape[0]
    num_kept = int(block_mask.sum())
    kept = np.where(block_mask)[0]
    indices = np.tile(kept, max_blocks) + block_size * np.repeat(
        np.arange(max_blocks), num_kept)
    total_steps = num_steps + prev_steps
    num_blocks = math.ceil(total_steps / block_size)
    ind = indices[:num_blocks * num_kept]
    ind = ind[(prev_steps <= ind) & (ind < total_steps)]
    return (ind - prev_steps).astype(np.int32)


if __name__ == "__main__":
    # Deterministic small config: block_size=6, max_blocks=8.
    key = jax.random.PRNGKey(0)
    block_size = 6
    max_blocks = 8
    mask = np.asarray(
        jax.random.bernoulli(key, p=0.6, shape=(block_size,)), dtype=bool)
    if not mask.any():
        mask[0] = True  # Slicer requires at least one kept token

    slicer = SlicerPallas(max_blocks, mask)

    queries = [(9, 0), (9, 5), (13, 7), (4, 20), (1, 0), (48, 0), (3, 45)]

    # Batched path: ONE pallas_call over grid=(B,), ONE host->device params
    # transfer, results stay on device until the single verification pull.
    params = jnp.asarray(queries, dtype=jnp.int32)            # (B, 2)
    out, cnt = slicer.compute_slices(params)
    jax.block_until_ready((out, cnt))

    out_h = np.asarray(out)   # single D2H transfer, verification only
    cnt_h = np.asarray(cnt)

    ok = True
    for qi, (num_steps, prev_steps) in enumerate(queries):
        ref = _reference_compute_slice(max_blocks, mask, num_steps, prev_steps)
        n = int(cnt_h[qi])
        got = out_h[qi, :n]
        if n != ref.shape[0] or not np.array_equal(got, ref):
            ok = False
            print(f"MISMATCH num_steps={num_steps} prev_steps={prev_steps}: "
                  f"got {got}, ref {ref}")

    # Also exercise the single-query (PyTorch-signature) path once.
    out1, cnt1 = slicer.compute_slice(13, 7)
    jax.block_until_ready((out1, cnt1))
    ref1 = _reference_compute_slice(max_blocks, mask, 13, 7)
    n1 = int(cnt1)
    got1 = np.asarray(out1)[:n1]
    if n1 != ref1.shape[0] or not np.array_equal(got1, ref1):
        ok = False
        print(f"MISMATCH single-query path: got {got1}, ref {ref1}")

    if ok:
        print("KERNEL_OK")
</pallas_src>

<mosaic_0001>
module attributes {stable_mosaic.version = 11 : i64} {
  func.func @_slicer_kernel(%arg0: i32, %arg1: memref<7x2xi32, #tpu.memory_space<smem>>, %arg2: memref<1x128xi32, #tpu.memory_space<vmem>>, %arg3: memref<1x1x128xi32, #tpu.memory_space<vmem>>, %arg4: memref<7xi32, #tpu.memory_space<smem>>) attributes {dimension_semantics = [#tpu.dimension_semantics<arbitrary>], iteration_bounds = array<i64: 7>, scalar_prefetch = 1 : i64, scratch_operands = 0 : i64, tpu.core_type = #tpu.core_type<tc>, window_params = [{pipeline_mode = #tpu.pipeline_mode<synchronous>, transform_indices = @transform_0, window_bounds = array<i64: 1, 128>}, {transform_indices = @transform_1, window_bounds = array<i64: 1, 1, 128>}, {transform_indices = @transform_2, window_bounds = array<i64: 7>}]} {
    %0 = arith.index_cast %arg0 : i32 to index
    %c0 = arith.constant 0 : index
    %1 = memref.load %arg1[%0, %c0] : memref<7x2xi32, #tpu.memory_space<smem>>
    %2 = arith.index_cast %arg0 : i32 to index
    %c1 = arith.constant 1 : index
    %3 = memref.load %arg1[%2, %c1] : memref<7x2xi32, #tpu.memory_space<smem>>
    %4 = arith.addi %1, %3 : i32
    %c0_0 = arith.constant 0 : index
    %c0_1 = arith.constant 0 : index
    %5 = vector.load %arg2[%c0_0, %c0_1] : memref<1x128xi32, #tpu.memory_space<vmem>>, vector<1x128xi32>
    %6 = tpu.iota {dimensions = array<i32: 0>} : vector<2x128xi32>
    %c0_i32 = arith.constant 0 : i32
    %7 = vector.broadcast %c0_i32 : i32 to vector<2x128xi32>
    %8 = arith.cmpi eq, %6, %7 : vector<2x128xi32>
    %9 = vector.broadcast %3 : i32 to vector<2x128xi32>
    %10 = vector.broadcast %4 : i32 to vector<2x128xi32>
    %11 = arith.select %8, %9, %10 : vector<2x128xi1>, vector<2x128xi32>
    %12 = vector.broadcast %5 : vector<1x128xi32> to vector<2x128xi32>
    %13 = arith.cmpi slt, %12, %11 : vector<2x128xi32>
    %14 = arith.extui %13 : vector<2x128xi1> to vector<2x128xi32>
    %cst = arith.constant dense<0> : vector<2xi32>
    %15 = vector.multi_reduction <add>, %14, %cst [1] : vector<2x128xi32> to vector<2xi32>
    %16 = vector.shape_cast %15 : vector<2xi32> to vector<2x1xi32>
    %17 = vector.extract_strided_slice %16 {offsets = [0, 0], sizes = [1, 1], strides = [1, 1]} : vector<2x1xi32> to vector<1x1xi32>
    %18 = vector.extract %17[0, 0] : i32 from vector<1x1xi32>
    %19 = vector.extract_strided_slice %16 {offsets = [1, 0], sizes = [1, 1], strides = [1, 1]} : vector<2x1xi32> to vector<1x1xi32>
    %20 = vector.extract %19[0, 0] : i32 from vector<1x1xi32>
    %21 = arith.subi %20, %18 : i32
    %22 = vector.broadcast %3 : i32 to vector<1x128xi32>
    %23 = arith.subi %5, %22 : vector<1x128xi32>
    %c0_i32_2 = arith.constant 0 : i32
    %24 = arith.cmpi eq, %18, %c0_i32_2 : i32
    %c128_i32 = arith.constant 128 : i32
    %25 = arith.subi %c128_i32, %18 : i32
    %c0_i32_3 = arith.constant 0 : i32
    %26 = arith.select %24, %c0_i32_3, %25 : i32
    %27 = tpu.dynamic_rotate %23 by %26 dim 1 : vector<1x128xi32>, i32 -> vector<1x128xi32>
    %28 = tpu.iota {dimensions = array<i32: 1>} : vector<1x128xi32>
    %29 = vector.broadcast %21 : i32 to vector<1x128xi32>
    %30 = arith.cmpi slt, %28, %29 : vector<1x128xi32>
    %c-1_i32 = arith.constant -1 : i32
    %31 = vector.broadcast %c-1_i32 : i32 to vector<1x128xi32>
    %32 = arith.select %30, %27, %31 : vector<1x128xi1>, vector<1x128xi32>
    %33 = vector.shape_cast %32 : vector<1x128xi32> to vector<1x1x128xi32>
    %c0_4 = arith.constant 0 : index
    %c0_5 = arith.constant 0 : index
    %c0_6 = arith.constant 0 : index
    %34 = vector.load %arg3[%c0_4, %c0_5, %c0_6] : memref<1x1x128xi32, #tpu.memory_space<vmem>>, vector<1x1x128xi32>
    tpu.vector_store %arg3[%c0_4, %c0_5, %c0_6], %33 {strides = array<i32>} : memref<1x1x128xi32, #tpu.memory_space<vmem>>, vector<1x1x128xi32>,
    %35 = arith.index_cast %arg0 : i32 to index
    %36 = memref.load %arg4[%35] : memref<7xi32, #tpu.memory_space<smem>>
    memref.store %21, %arg4[%35] : memref<7xi32, #tpu.memory_space<smem>>
    return
  }
  func.func @transform_0(%arg0: i32, %arg1: memref<7x2xi32, #tpu.memory_space<smem>>) -> (i32, i32) {
    %c0_i32 = arith.constant 0 : i32
    %c0_i32_0 = arith.constant 0 : i32
    %c0_i32_1 = arith.constant 0 : i32
    return %c0_i32, %c0_i32_0 : i32, i32
  }
  func.func @transform_1(%arg0: i32, %arg1: memref<7x2xi32, #tpu.memory_space<smem>>) -> (i32, i32, i32) {
    %c0_i32 = arith.constant 0 : i32
    %c0_i32_0 = arith.constant 0 : i32
    %c0_i32_1 = arith.constant 0 : i32
    return %arg0, %c0_i32, %c0_i32_0 : i32, i32, i32
  }
  func.func @transform_2(%arg0: i32, %arg1: memref<7x2xi32, #tpu.memory_space<smem>>) -> i32 {
    %c0_i32 = arith.constant 0 : i32
    %c0_i32_0 = arith.constant 0 : i32
    return %c0_i32 : i32
  }
}

</mosaic_0001>

<llo_original>
// kernel: _compute_slices_jit.1
$region0: #{_compute_slices_jit.1}
  #allocation0 [shape = 'u32[]', space=smem, size = 0x4, offset = 0x4, fixed_abs, tag = 'smem constant byte address 0x4 - core index']
  #allocation1 [shape = 'u32[72,128]{1,0:T(1,128)}', space=vmem, size = 0x9000, scoped, tag = 'internal scratch']
  #allocation2 [shape = 's32[1]{0}', space=sflag, size = 0x4, scoped, tag = 'scoped memory for _compute_slices_jit.1']
  #allocation3 [shape = 'u8[4096]{0}', space=smem, size = 0x1000, scoped, tag = 'prefetched SMEM operand 0']
  %s0 = inlined_call_operand.vmem [shape: s32[7,2], index: 0, kind: input, shape index: {}]
  %s1 = inlined_call_operand.vmem [shape: s32[1,128], index: 1, kind: input, shape index: {}]
  %s2 = inlined_call_operand.vmem [shape: s32[7,1,128], index: 2, kind: output, shape index: {0}]
  %s3 = inlined_call_operand.hbm [shape: s32[7], index: 3, kind: output, shape index: {1}]
  %4 = xla_tuple %s2, %s3
  %s5 = sld [smem:[#allocation0]]
  $region45: #{_compute_slices_jit.1} parent=0
    _
  %s7 = ssub.s32 1, %s5
  %s8 = scalar_select 0, %s7, %s5
  %s10 = sshll.u32 %s0, 4
  %s11 = int_to_ptr.vmem [resolvable:$true] %s10
  %13 = dma.vmem_to_smem %s11, 128, [#allocation3], [#allocation2]
  %15 = dma.done [#allocation2], 128
  %16 = sfence
  $region1: #{_compute_slices_jit.1} parent=0
    #allocation4 [shape = 'u8[512]{0}', space=smem, size = 0x200, scoped, tag = 'output window, operand 1, single buffered']
    #allocation5 [shape = 's32[2]{0}', space=sflag, size = 0x8, scoped, tag = 'scoped memory for _compute_slices_jit.1']
    %17 = vsyncpa [#allocation5], 0
    loop: start=0, step=1, limit=9
    $region2: #{_compute_slices_jit.1} parent=1 // loop_pre_header
      _
    $region3: #{_compute_slices_jit.1} parent=1 // loop_header
      %s19 = sphi 0, %s23
      %p20 = scmp.ge.s32.totalorder %s19, 9
      %s27 = sphi 0, %s27
      %s29 = sphi 0, %s27
      %s30 = sphi 0, %s29
      %s44 = sphi 0, %s30
      %s50 = sphi 0, %s52
      %s53 = sphi 0, %s50
      %s54 = sphi 0, %s53
      %s70 = sphi 0, %s54
      %s74 = sphi 0, %s74
      %s76 = sphi 0, %s74
      %s77 = sphi 0, %s76
      %s91 = sphi 0, %s77
    $region4: #{_compute_slices_jit.1} parent=1 // loop_header_branch
      %22 = sbr.rel (%p20) target = $region8
    $region5: #{_compute_slices_jit.1} parent=1 // loop_body
      %s24 = ssub.s32 %s19, 1
      %s25 = ssub.s32 %s19, 2
      %s26 = sadd.s32 %s19, 1
      %s28 = sadd.s32 %s27, 1
      %p31 = scmp.eq.s32.totalorder %s19, 6
      %p32 = scmp.ne.s32.totalorder %s27, %s29
      %p33 = scmp.eq.s32.totalorder %s19, 0
      %p34 = por %p32, %p33
      %p35 = scmp.ne.s32.totalorder %s27, %s29
      %p36 = scmp.eq.s32.totalorder %s24, 6
      %p37 = por %p35, %p36
      %p38 = scmp.ne.s32.totalorder %s29, %s30
      %p39 = scmp.eq.s32.totalorder %s24, 0
      %p40 = por %p38, %p39
      %p41 = scmp.ne.s32.totalorder %s29, %s30
      %p42 = scmp.eq.s32.totalorder %s25, 6
      %p43 = por %p41, %p42
      %p45 = scmp.ne.s32.totalorder %s30, %s44
      %p46 = scmp.eq.s32.totalorder %s25, 0
      %p47 = por %p45, %p46
      %s48 = ssub.s32 %s19, %s26
      %p49 = scmp.eq.s32.totalorder %s48, 0
      %s51 = sadd.s32 %s50, 1
      %s52 = scalar_select %p49, %s50, %s51
      %p55 = pneg %p49
      %p56 = scmp.eq.s32.totalorder %s19, 6
      %p57 = por %p55, %p56
      %p58 = scmp.ne.s32.totalorder %s50, %s53
      %p59 = scmp.eq.s32.totalorder %s19, 0
      %p60 = por %p58, %p59
      %p61 = scmp.ne.s32.totalorder %s50, %s53
      %p62 = scmp.eq.s32.totalorder %s24, 6
      %p63 = por %p61, %p62
      %p64 = scmp.ne.s32.totalorder %s53, %s54
      %p65 = scmp.eq.s32.totalorder %s24, 0
      %p66 = por %p64, %p65
      %p67 = scmp.ne.s32.totalorder %s53, %s54
      %p68 = scmp.eq.s32.totalorder %s25, 6
      %p69 = por %p67, %p68
      %p71 = scmp.ne.s32.totalorder %s54, %s70
      %p72 = scmp.eq.s32.totalorder %s25, 0
      %p73 = por %p71, %p72
      %s75 = sadd.s32 %s74, 1
      %p78 = scmp.eq.s32.totalorder %s19, 6
      %p79 = scmp.ne.s32.totalorder %s74, %s76
      %p80 = scmp.eq.s32.totalorder %s19, 0
      %p81 = por %p79, %p80
      %p82 = scmp.ne.s32.totalorder %s74, %s76
      %p83 = scmp.eq.s32.totalorder %s24, 6
      %p84 = por %p82, %p83
      %p85 = scmp.ne.s32.totalorder %s76, %s77
      %p86 = scmp.eq.s32.totalorder %s24, 0
      %p87 = por %p85, %p86
      %p88 = scmp.ne.s32.totalorder %s76, %s77
      %p89 = scmp.eq.s32.totalorder %s25, 6
      %p90 = por %p88, %p89
      %p92 = scmp.ne.s32.totalorder %s77, %s91
      %p93 = scmp.eq.s32.totalorder %s25, 0
      %p94 = por %p92, %p93
      %p95 = scmp.le.s32.totalorder 1, %s19
      %p96 = scmp.lt.s32.totalorder %s19, 8
      %p97 = pnand %p95, %p96
      %p98 = pneg %p97
      // Predicated region
      $region9: #{_compute_slices_jit.1} parent=5 // pred_check
        _
      $region10: #{_compute_slices_jit.1} parent=5 // pred_check_branch
        %100 = sbr.rel (%p97) target = $region12
      $region11: #{_compute_slices_jit.1} parent=5 // pred_region
        %s101 = ssub.s32 %s19, 1
        // Predicated region
        $region13: #{_compute_slices_jit.1} parent=11 // pred_check
          %p102 = pneg %p40
        $region14: #{_compute_slices_jit.1} parent=11 // pred_check_branch
          %104 = sbr.rel (%p102) target = $region16
        $region15: #{_compute_slices_jit.1} parent=11 // pred_region
          _
        $region16: #{_compute_slices_jit.1} parent=11 // pred_fallthru
          _
      $region12: #{_compute_slices_jit.1} parent=5 // pred_fallthru
        _
      %p105 = scmp.lt.s32.totalorder %s19, 7
      // Predicated region
      $region17: #{_compute_slices_jit.1} parent=5 // pred_check
        %p106 = pneg %p105
      $region18: #{_compute_slices_jit.1} parent=5 // pred_check_branch
        %108 = sbr.rel (%p106) target = $region20
      $region19: #{_compute_slices_jit.1} parent=5 // pred_region
        _
      $region20: #{_compute_slices_jit.1} parent=5 // pred_fallthru
        _
      %p109 = scmp.le.s32.totalorder 1, %s19
      %p110 = scmp.lt.s32.totalorder %s19, 8
      %p111 = pnand %p109, %p110
      %p112 = pneg %p111
      // Predicated region
      $region21: #{_compute_slices_jit.1} parent=5 // pred_check
        _
      $region22: #{_compute_slices_jit.1} parent=5 // pred_check_branch
        %114 = sbr.rel (%p111) target = $region24
      $region23: #{_compute_slices_jit.1} parent=5 // pred_region
        %s115 = ssub.s32 %s19, 1
        %p116 = pneg %p40
        %p117 = pneg %p37
        %p118 = pneg %p66
        %p119 = pneg %p63
        %p120 = scmp.lt.s32.totalorder %s24, 6
        %s121 = scalar_select %p120, %s24, 6
        %s122 = scalar_lea.vmem %s2, %s121
        %p123 = pneg %p87
        %p124 = pneg %p84
        %p125 = scmp.lt.s32.totalorder %s24, 6
        %s126 = scalar_select %p125, %s24, 6
        %s127 = scalar_lea.vmem %s2, %s126
        %s128 = smul.u32 %s24, 128
        %s129 = sld [smem:[#allocation3 + %s128]]
        %s130 = sadd.s32 %s128, 1
        %s131 = sld [smem:[#allocation3 + %s130]]
        %s132 = sadd.s32 %s129, %s131
        %v133 = vld [vmem:[%s1] sm:$0x1]
        %v134 = vlaneseq
        %v135 = vshrl.u32 %v134, 7
        %vm136 = vcmp.eq.s32.totalorder %v135, 0
        %v137 = vstv %s131
        %v138 = vstv %s132
        %v139 = vsel %vm136, %v137, %v138
        %v140 = vperm.slane %v133, 0
        %vm141 = vcmp.lt.s32.totalorder %v140, %v139
        %v142 = vsel %vm141, 1, 0
        %vm143 = vcmask 1041408
        %v144 = vsel %vm143, %v142, 0
        %v145 = vand.u32 %v144, 65535
        %v146 = vshrl.u32 %v144, 16
        %v147 = vcvt.s32.f32 %v145
        %v148 = vcvt.s32.f32 %v146
        %149 = vadd.xlane.f32.xlu0 %v147
        %v150 = vpop.xlane.xlu0 %149
        %151 = vadd.xlane.f32.xlu0 %v148
        %v152 = vpop.xlane.xlu0 %151
        %v153 = vcvt.f32.s32 %v150
        %v154 = vcvt.f32.s32 %v152
        %v155 = vshll.u32 %v154, 16
        %v156 = vadd.s32 %v155, %v153
        %s157 = vtos %v156
        %v158 = vrot.slane %v156, 1
        %s159 = vtos %v158
        %s160 = ssub.s32 %s159, %s157
        %v161 = vsub.s32 %v133, %v137
        %p162 = scmp.eq.s32.totalorder %s157, 0
        %s163 = ssub.s32 128, %s157
        %s164 = scalar_select %p162, 0, %s163
        %s165 = sand.u32 %s164, 127
        %s166 = sand.u32 %s165, 127
        %167 = vrot.lane.b32.xlu0 %v161, %s166
        %v168 = vpop.permute.xlu0 %167
        %v169 = vlaneseq
        %v170 = vand.u32 %v169, 127
        %v171 = vstv %s160
        %vm172 = vcmp.lt.s32.totalorder %v170, %v171
        %v173 = vsel %vm172, %v168, 4294967295
        %174 = vst [vmem:[%s127] sm:$0x1] %v173
        %s175 = scalar_lea.smem [#allocation4], %s24
        %176 = sst [smem:[%s175]] %s160
        %p177 = scmp.lt.s32.totalorder %s24, 6
        %s178 = scalar_select %p177, %s24, 6
        %s179 = scalar_lea.vmem %s2, %s178
        // Predicated region
        $region25: #{_compute_slices_jit.1} parent=23 // pred_check
          %p180 = pneg %p63
        $region26: #{_compute_slices_jit.1} parent=23 // pred_check_branch
          %182 = sbr.rel (%p180) target = $region28
        $region27: #{_compute_slices_jit.1} parent=23 // pred_region
          _
        $region28: #{_compute_slices_jit.1} parent=23 // pred_fallthru
          _
        // Predicated region
        $region29: #{_compute_slices_jit.1} parent=23 // pred_check
          %p183 = pneg %p84
        $region30: #{_compute_slices_jit.1} parent=23 // pred_check_branch
          %185 = sbr.rel (%p183) target = $region32
        $region31: #{_compute_slices_jit.1} parent=23 // pred_region
          %187 = vsyncadd [#allocation5], 0
          %s189 = sshll.u32 %s3, 4
          %s190 = int_to_ptr.hbm [resolvable:$true] %s189
          %192 = dma.smem_to_hbm [#allocation4], 16, %s190, [#allocation5]
        $region32: #{_compute_slices_jit.1} parent=23 // pred_fallthru
          _
        // Predicated region
        $region33: #{_compute_slices_jit.1} parent=23 // pred_check
          %p193 = pneg %p84
        $region34: #{_compute_slices_jit.1} parent=23 // pred_check_branch
          %195 = sbr.rel (%p193) target = $region36
        $region35: #{_compute_slices_jit.1} parent=23 // pred_region
          %197 = dma.done [#allocation5], 16
        $region36: #{_compute_slices_jit.1} parent=23 // pred_fallthru
          _
        %198 = sfence
      $region24: #{_compute_slices_jit.1} parent=5 // pred_fallthru
        _
      %p199 = scmp.le.s32.totalorder 2, %s19
      // Predicated region
      $region37: #{_compute_slices_jit.1} parent=5 // pred_check
        %p200 = pneg %p199
      $region38: #{_compute_slices_jit.1} parent=5 // pred_check_branch
        %202 = sbr.rel (%p200) target = $region40
      $region39: #{_compute_slices_jit.1} parent=5 // pred_region
        %s203 = ssub.s32 %s19, 2
        // Predicated region
        $region41: #{_compute_slices_jit.1} parent=39 // pred_check
          %p204 = pneg %p69
        $region42: #{_compute_slices_jit.1} parent=39 // pred_check_branch
          %206 = sbr.rel (%p204) target = $region44
        $region43: #{_compute_slices_jit.1} parent=39 // pred_region
          %p207 = scmp.lt.s32.totalorder %s25, 6
          %s208 = scalar_select %p207, %s25, 6
          %s209 = scalar_lea.vmem %s2, %s208
        $region44: #{_compute_slices_jit.1} parent=39 // pred_fallthru
          _
      $region40: #{_compute_slices_jit.1} parent=5 // pred_fallthru
        _
    $region6: #{_compute_slices_jit.1} parent=1 // loop_footer
      %s23 = sadd.s32 1, %s19
    $region7: #{_compute_slices_jit.1} parent=1 // loop_footer_branch
      %18 = sbr.rel target = $region3
    $region8: #{_compute_slices_jit.1} parent=1 // loop_exit
      _
    %210 = vsyncpa [#allocation5], 1
    %s211 = scalar_lea.sflag [#allocation5], 1
    %212 = vsyncpa %s211, 1

</llo_original>
